<compile_context>
chip_gen: v7x
topology: tpu7x:2x2x1
jax: 0.10.0
libtpu: 0.0.40
codegen_flags: <defaults>
</compile_context>

<pallas_src>
import functools

import jax
import jax.numpy as jnp
from jax.experimental import pallas as pl
from jax.experimental.pallas import tpu as pltpu

FLOW_WEIGHT = 1.0     # FlowLoss.__init__ default
COLOR_WEIGHT = 100.0  # FlowLoss.__init__ default


def _pick_tile(P, cap=2048):
    """Largest pixel-tile <= cap that is a multiple of 128 and divides P."""
    if P <= cap:
        return P
    tp = cap - (cap % 128)
    while tp >= 128:
        if P % tp == 0:
            return tp
        tp -= 128
    return P  # fallback: single tile


def _vmem_limit_bytes(B, C, H, W, TP):
    """Rough scoped-VMEM request sized to the tile; capped for v7x (64 MiB)."""
    f32 = 4
    est = (2 * B * C * H * W * f32            # resident pred block (+ headroom)
           + 2 * B * (2 + 2 + C) * TP * f32   # double-buffered per-tile inputs
           + 2 * 2 * TP * f32                 # coords
           + (W + H) * TP * (f32 + 2)         # ax/ay f32 + bf16 copies
           + C * H * TP * f32                 # tmp (matmul result)
           + (4 + C) * TP * f32               # accumulators / misc
           + (1 << 20))                       # slack
    return int(min(64 * 1024 * 1024, max(32 * 1024 * 1024, 2 * est)))


def flow_loss_kernel(coords_ref, pre_ref, src_ref, gtf_ref, estf_ref, out_ref,
                     *, B, C, H, W):
    f32 = jnp.float32
    tp = gtf_ref.shape[-1]          # pixel-tile width (lane-dense)

    # ---- flow-independent, hoisted out of the batch loop ---------------------
    xx = coords_ref[0:1, :].astype(f32)     # (1, tp) output-pixel column
    yy = coords_ref[1:2, :].astype(f32)     # (1, tp) output-pixel row

    sx_scale = float(W) / float(max(W - 1, 1))
    sy_scale = float(H) / float(max(H - 1, 1))

    # source-index planes for the hat-function bilinear weights
    s_f = jax.lax.broadcasted_iota(jnp.int32, (W, tp), 0).astype(f32)  # cols
    r_f = jax.lax.broadcasted_iota(jnp.int32, (H, tp), 0).astype(f32)  # rows

    flow_acc = jnp.zeros((2, tp), f32)      # lane-dense |gt - est| partials
    color_acc = jnp.zeros((1, tp), f32)     # lane-dense |warped*mask - tgt|

    # Static batch loop (B is small for a loss); for large B add an inner
    # "arbitrary" batch grid axis instead.
    for b in range(B):
        gtf = gtf_ref[b].astype(f32)        # (2, tp)
        estf = estf_ref[b].astype(f32)      # (2, tp)

        # ---- flow L1 term (lane-dense partial sum) ---------------------------
        flow_acc = flow_acc + jnp.abs(gtf - estf)

        fx = gtf[0:1, :]
        fy = gtf[1:2, :]
        # torch normalization 2*v/(size-1)-1 folded with align_corners=False
        # un-normalization:  src = v*size/(size-1) - 0.5
        sx = (xx + fx) * sx_scale - 0.5
        sy = (yy + fy) * sy_scale - 0.5

        # ---- validity mask: grid_sample(ones, vgrid, padding_mode='zeros') ---
        x0u = jnp.floor(sx)
        y0u = jnp.floor(sy)
        x1u = x0u + 1.0
        y1u = y0u + 1.0
        wx1u = sx - x0u
        wx0u = 1.0 - wx1u
        wy1u = sy - y0u
        wy0u = 1.0 - wy1u
        inb_x0 = ((x0u >= 0.0) & (x0u <= float(W - 1))).astype(f32)
        inb_x1 = ((x1u >= 0.0) & (x1u <= float(W - 1))).astype(f32)
        inb_y0 = ((y0u >= 0.0) & (y0u <= float(H - 1))).astype(f32)
        inb_y1 = ((y1u >= 0.0) & (y1u <= float(H - 1))).astype(f32)
        mask_val = (wy0u * wx0u * inb_y0 * inb_x0
                    + wy0u * wx1u * inb_y0 * inb_x1
                    + wy1u * wx0u * inb_y1 * inb_x0
                    + wy1u * wx1u * inb_y1 * inb_x1)
        # mask[mask < 0.9999] = 0 ; mask[mask > 0] = 1
        mask = (mask_val >= 0.9999).astype(f32)        # (1, tp)

        # ---- separable bilinear warp, padding_mode='border' (clip coords) ----
        sxb = jnp.clip(sx, 0.0, float(W - 1))
        syb = jnp.clip(sy, 0.0, float(H - 1))
        # hat-function weight planes (== one-hot * bilinear weights)
        ax = jnp.maximum(0.0, 1.0 - jnp.abs(s_f - sxb))   # (W, tp)
        ay = jnp.maximum(0.0, 1.0 - jnp.abs(r_f - syb))   # (H, tp)

        # pred_img = pre/2 + 0.5 ; x-interpolation on the MXU in bf16.
        pred = pre_ref[b].astype(f32) * 0.5 + 0.5          # (C*H, W)
        tmp = jnp.dot(pred.astype(jnp.bfloat16), ax.astype(jnp.bfloat16),
                      preferred_element_type=f32)          # (C*H, tp)

        # target_img = src/2 + 0.5
        target = src_ref[b].astype(f32) * 0.5 + 0.5        # (C, tp)

        # y-interpolation: per-channel VPU multiply + sublane reduce.
        # Static H-aligned slices (H % 8 == 0 keeps them layout-free).
        for c in range(C):
            wc = jnp.sum(tmp[c * H:(c + 1) * H, :] * ay, axis=0, keepdims=True)
            color_acc = color_acc + jnp.abs(wc * mask - target[c:c + 1, :])

    # ---- per-tile lane-dense partials -> two scalars in this tile's block ----
    flow_part = jnp.sum(flow_acc)
    color_part = jnp.sum(color_acc)

    sub = jax.lax.broadcasted_iota(jnp.int32, out_ref.shape, 1)
    lane = jax.lax.broadcasted_iota(jnp.int32, out_ref.shape, 2)
    out_ref[...] = (jnp.where((sub == 0) & (lane == 0), flow_part, 0.0)
                    + jnp.where((sub == 0) & (lane == 1), color_part, 0.0))


def flow_loss_forward(pre_img, src_img, gt_flow, flow_net_w,
                      flow_weight=FLOW_WEIGHT, color_weight=COLOR_WEIGHT):
    """FlowLoss.forward.  Returns (loss_total, info) with JAX scalars."""
    B, C, H, W = pre_img.shape
    assert gt_flow.shape == (B, 2, H, W)
    P = H * W

    # --- plain-JAX glue: RAFT stand-in (deterministic 1x1 conv over the
    # concatenated target/pred images).
    # TODO(synk): the real RAFT flow network is not translatable to Pallas.
    target_img = src_img / 2.0 + 0.5
    pred_img = pre_img / 2.0 + 0.5
    x = jnp.concatenate([target_img, pred_img], axis=1)          # [B, 2C, H, W]
    flow_est = jnp.einsum("kc,bchw->bkhw", flow_net_w, x)        # [B, 2, H, W]

    TP = _pick_tile(P)
    T = P // TP

    # Wrapper-side reshapes (free layout plumbing): lane-dense last dim = H*W,
    # except the warp-matmul LHS which needs (C*H, W).
    pre_flat = pre_img.reshape(B, C * H, W)
    src_flat = src_img.reshape(B, C, P)
    gtf_flat = gt_flow.reshape(B, 2, P)
    estf_flat = flow_est.reshape(B, 2, P)
    # Base pixel coordinates, precomputed once (removes in-kernel floor-div).
    xx = jnp.tile(jnp.arange(W, dtype=jnp.float32)[None, :], (H, 1)).reshape(1, P)
    yy = jnp.tile(jnp.arange(H, dtype=jnp.float32)[:, None], (1, W)).reshape(1, P)
    coords = jnp.concatenate([xx, yy], axis=0)                   # (2, P)

    kernel = functools.partial(flow_loss_kernel, B=B, C=C, H=H, W=W)

    flops = 2 * B * (C * H) * W * P + 32 * B * P * (W + H + C * H)
    bytes_accessed = 4 * (B * C * H * W + B * C * P + 4 * B * P + 2 * P
                          + T * 8 * 128)

    out = pl.pallas_call(
        kernel,
        out_shape=jax.ShapeDtypeStruct((T, 8, 128), jnp.float32),
        grid=(T,),
        in_specs=[
            pl.BlockSpec((2, TP), lambda t: (0, t)),             # base coords
            pl.BlockSpec((B, C * H, W), lambda t: (0, 0, 0)),    # pred, resident
            pl.BlockSpec((B, C, TP), lambda t: (0, 0, t)),       # src tile
            pl.BlockSpec((B, 2, TP), lambda t: (0, 0, t)),       # gt flow tile
            pl.BlockSpec((B, 2, TP), lambda t: (0, 0, t)),       # est flow tile
        ],
        out_specs=pl.BlockSpec((1, 8, 128), lambda t: (t, 0, 0)),
        compiler_params=pltpu.CompilerParams(
            dimension_semantics=("parallel",),                   # v7x: 2-TC split
            vmem_limit_bytes=_vmem_limit_bytes(B, C, H, W, TP)),
        cost_estimate=pl.CostEstimate(flops=int(flops), transcendentals=0,
                                      bytes_accessed=int(bytes_accessed)),
    )(coords, pre_flat, src_flat, gtf_flat, estf_flat)

    # Sum the handful of per-tile partials in the wrapper (JAX scalars,
    # no host sync).
    flow_loss = jnp.sum(out[:, 0, 0]) * (1.0 / float(B * 2 * H * W))
    color_loss = jnp.sum(out[:, 0, 1]) * (1.0 / float(B * C * H * W))
    loss_total = flow_weight * flow_loss + color_weight * color_loss
    info = {
        "flow_loss": flow_loss,
        "color_loss": color_loss,
        # TODO(synk): info['flow_im'] (flow_to_image + PIL) has no Pallas/JAX
        # equivalent.
    }
    return loss_total, info


# ----------------------------------------------------------------------------
# Pure-JAX (gather-based) reference of the same forward pass, for validation.
# ----------------------------------------------------------------------------
def _reference_flow_loss(pre_img, src_img, gt_flow, flow_net_w):
    f32 = jnp.float32
    B, C, H, W = pre_img.shape
    target = src_img.astype(f32) / 2.0 + 0.5
    pred = pre_img.astype(f32) / 2.0 + 0.5
    x = jnp.concatenate([target, pred], axis=1)
    flow_est = jnp.einsum("kc,bchw->bkhw", flow_net_w, x)

    flow_loss = jnp.mean(jnp.abs(gt_flow - flow_est))

    xx = jnp.tile(jnp.arange(W, dtype=f32)[None, :], (H, 1))
    yy = jnp.tile(jnp.arange(H, dtype=f32)[:, None], (1, W))
    sx_scale = float(W) / float(max(W - 1, 1))
    sy_scale = float(H) / float(max(H - 1, 1))

    def corners(sx, sy):
        x0 = jnp.floor(sx)
        y0 = jnp.floor(sy)
        x1 = x0 + 1.0
        y1 = y0 + 1.0
        wx1 = sx - x0
        wx0 = 1.0 - wx1
        wy1 = sy - y0
        wy0 = 1.0 - wy1
        return [(x0, y0, wx0 * wy0), (x1, y0, wx1 * wy0),
                (x0, y1, wx0 * wy1), (x1, y1, wx1 * wy1)]

    color_sum = jnp.zeros((), f32)
    for b in range(B):
        sx = (xx + gt_flow[b, 0]) * sx_scale - 0.5
        sy = (yy + gt_flow[b, 1]) * sy_scale - 0.5
        # mask: zeros padding, unclipped coords
        mask_val = jnp.zeros((H, W), f32)
        for (cx, cy, w) in corners(sx, sy):
            inb = ((cx >= 0) & (cx <= W - 1) & (cy >= 0) & (cy <= H - 1))
            mask_val = mask_val + w * inb.astype(f32)
        mask = (mask_val >= 0.9999).astype(f32)
        # image warp: border padding -> clip source coords
        sxb = jnp.clip(sx, 0.0, float(W - 1))
        syb = jnp.clip(sy, 0.0, float(H - 1))
        warped = jnp.zeros((C, H, W), f32)
        for (cx, cy, w) in corners(sxb, syb):
            xi = jnp.clip(cx, 0.0, float(W - 1)).astype(jnp.int32)
            yi = jnp.clip(cy, 0.0, float(H - 1)).astype(jnp.int32)
            warped = warped + w[None] * pred[b][:, yi, xi]
        color_sum = color_sum + jnp.sum(jnp.abs(warped * mask[None] - target[b]))

    color_loss = color_sum / float(B * C * H * W)
    total = FLOW_WEIGHT * flow_loss + COLOR_WEIGHT * color_loss
    return total, flow_loss, color_loss


if __name__ == "__main__":
    key = jax.random.PRNGKey(0)
    k1, k2, k3, k4 = jax.random.split(key, 4)

    B, C, H, W = 2, 3, 16, 16
    pre_img = jax.random.normal(k1, (B, C, H, W), jnp.float32)
    src_img = jax.random.normal(k2, (B, C, H, W), jnp.float32)
    gt_flow = 2.0 * jax.random.normal(k3, (B, 2, H, W), jnp.float32)
    # deterministic stand-in "flow net" weights (2 outputs, 2C inputs)
    flow_net_w = 0.1 * jax.random.normal(k4, (2, 2 * C), jnp.float32)

    loss_total, info = flow_loss_forward(pre_img, src_img, gt_flow, flow_net_w)
    loss_total = jax.block_until_ready(loss_total)

    ref_total, ref_flow, ref_color = _reference_flow_loss(
        pre_img, src_img, gt_flow, flow_net_w)

    assert jnp.isfinite(loss_total)
    assert jnp.allclose(info["flow_loss"], ref_flow, rtol=2e-2, atol=1e-4), (
        info["flow_loss"], ref_flow)
    assert jnp.allclose(info["color_loss"], ref_color, rtol=2e-2, atol=1e-3), (
        info["color_loss"], ref_color)
    assert jnp.allclose(loss_total, ref_total, rtol=2e-2, atol=1e-2), (
        loss_total, ref_total)
    print("KERNEL_OK")
</pallas_src>

<mosaic_0001>
module attributes {stable_mosaic.version = 11 : i64} {
  func.func @flow_loss_kernel(%arg0: i32, %arg1: memref<2x256xf32, #tpu.memory_space<vmem>>, %arg2: memref<2x48x16xf32, #tpu.memory_space<vmem>>, %arg3: memref<2x3x256xf32, #tpu.memory_space<vmem>>, %arg4: memref<2x2x256xf32, #tpu.memory_space<vmem>>, %arg5: memref<2x2x256xf32, #tpu.memory_space<vmem>>, %arg6: memref<1x8x128xf32, #tpu.memory_space<vmem>>) attributes {dimension_semantics = [#tpu.dimension_semantics<parallel>], iteration_bounds = array<i64: 1>, scalar_prefetch = 0 : i64, scratch_operands = 0 : i64, tpu.core_type = #tpu.core_type<tc>, window_params = [{transform_indices = @transform_0, window_bounds = array<i64: 2, 256>}, {pipeline_mode = #tpu.pipeline_mode<synchronous>, transform_indices = @transform_1, window_bounds = array<i64: 2, 48, 16>}, {transform_indices = @transform_2, window_bounds = array<i64: 2, 3, 256>}, {transform_indices = @transform_3, window_bounds = array<i64: 2, 2, 256>}, {transform_indices = @transform_4, window_bounds = array<i64: 2, 2, 256>}, {transform_indices = @transform_5, window_bounds = array<i64: 1, 8, 128>}]} {
    %c0 = arith.constant 0 : index
    %c0_0 = arith.constant 0 : index
    %0 = vector.load %arg1[%c0, %c0_0] : memref<2x256xf32, #tpu.memory_space<vmem>>, vector<1x256xf32>
    %c1 = arith.constant 1 : index
    %c0_1 = arith.constant 0 : index
    %1 = vector.load %arg1[%c1, %c0_1] : memref<2x256xf32, #tpu.memory_space<vmem>>, vector<1x256xf32>
    %2 = tpu.iota {dimensions = array<i32: 0>} : vector<16x256xi32>
    %3 = arith.sitofp %2 : vector<16x256xi32> to vector<16x256xf32>
    %4 = tpu.iota {dimensions = array<i32: 0>} : vector<16x256xi32>
    %5 = arith.sitofp %4 : vector<16x256xi32> to vector<16x256xf32>
    %cst = arith.constant 0.000000e+00 : f32
    %6 = vector.broadcast %cst : f32 to vector<2x256xf32>
    %cst_2 = arith.constant 0.000000e+00 : f32
    %7 = vector.broadcast %cst_2 : f32 to vector<1x256xf32>
    %c0_3 = arith.constant 0 : index
    %c0_4 = arith.constant 0 : index
    %c0_5 = arith.constant 0 : index
    %8 = vector.load %arg4[%c0_3, %c0_4, %c0_5] : memref<2x2x256xf32, #tpu.memory_space<vmem>>, vector<1x2x256xf32>
    %9 = vector.shape_cast %8 : vector<1x2x256xf32> to vector<2x256xf32>
    %c0_6 = arith.constant 0 : index
    %c0_7 = arith.constant 0 : index
    %c0_8 = arith.constant 0 : index
    %10 = vector.load %arg5[%c0_6, %c0_7, %c0_8] : memref<2x2x256xf32, #tpu.memory_space<vmem>>, vector<1x2x256xf32>
    %11 = vector.shape_cast %10 : vector<1x2x256xf32> to vector<2x256xf32>
    %12 = arith.subf %9, %11 : vector<2x256xf32>
    %13 = math.absf %12 : vector<2x256xf32>
    %14 = arith.addf %6, %13 : vector<2x256xf32>
    %15 = vector.extract_strided_slice %9 {offsets = [0, 0], sizes = [1, 256], strides = [1, 1]} : vector<2x256xf32> to vector<1x256xf32>
    %16 = vector.extract_strided_slice %9 {offsets = [1, 0], sizes = [1, 256], strides = [1, 1]} : vector<2x256xf32> to vector<1x256xf32>
    %17 = arith.addf %0, %15 : vector<1x256xf32>
    %cst_9 = arith.constant 1.06666672 : f32
    %18 = vector.broadcast %cst_9 : f32 to vector<1x256xf32>
    %19 = arith.mulf %17, %18 : vector<1x256xf32>
    %cst_10 = arith.constant 5.000000e-01 : f32
    %20 = vector.broadcast %cst_10 : f32 to vector<1x256xf32>
    %21 = arith.subf %19, %20 : vector<1x256xf32>
    %22 = arith.addf %1, %16 : vector<1x256xf32>
    %cst_11 = arith.constant 1.06666672 : f32
    %23 = vector.broadcast %cst_11 : f32 to vector<1x256xf32>
    %24 = arith.mulf %22, %23 : vector<1x256xf32>
    %cst_12 = arith.constant 5.000000e-01 : f32
    %25 = vector.broadcast %cst_12 : f32 to vector<1x256xf32>
    %26 = arith.subf %24, %25 : vector<1x256xf32>
    %27 = math.floor %21 : vector<1x256xf32>
    %28 = math.floor %26 : vector<1x256xf32>
    %cst_13 = arith.constant 1.000000e+00 : f32
    %29 = vector.broadcast %cst_13 : f32 to vector<1x256xf32>
    %30 = arith.addf %27, %29 : vector<1x256xf32>
    %cst_14 = arith.constant 1.000000e+00 : f32
    %31 = vector.broadcast %cst_14 : f32 to vector<1x256xf32>
    %32 = arith.addf %28, %31 : vector<1x256xf32>
    %33 = arith.subf %21, %27 : vector<1x256xf32>
    %cst_15 = arith.constant 1.000000e+00 : f32
    %34 = vector.broadcast %cst_15 : f32 to vector<1x256xf32>
    %35 = arith.subf %34, %33 : vector<1x256xf32>
    %36 = arith.subf %26, %28 : vector<1x256xf32>
    %cst_16 = arith.constant 1.000000e+00 : f32
    %37 = vector.broadcast %cst_16 : f32 to vector<1x256xf32>
    %38 = arith.subf %37, %36 : vector<1x256xf32>
    %cst_17 = arith.constant 0.000000e+00 : f32
    %39 = vector.broadcast %cst_17 : f32 to vector<1x256xf32>
    %40 = arith.cmpf oge, %27, %39 : vector<1x256xf32>
    %cst_18 = arith.constant 1.500000e+01 : f32
    %41 = vector.broadcast %cst_18 : f32 to vector<1x256xf32>
    %42 = arith.cmpf ole, %27, %41 : vector<1x256xf32>
    %43 = arith.andi %40, %42 : vector<1x256xi1>
    %44 = arith.extui %43 : vector<1x256xi1> to vector<1x256xi32>
    %45 = arith.sitofp %44 : vector<1x256xi32> to vector<1x256xf32>
    %cst_19 = arith.constant 0.000000e+00 : f32
    %46 = vector.broadcast %cst_19 : f32 to vector<1x256xf32>
    %47 = arith.cmpf oge, %30, %46 : vector<1x256xf32>
    %cst_20 = arith.constant 1.500000e+01 : f32
    %48 = vector.broadcast %cst_20 : f32 to vector<1x256xf32>
    %49 = arith.cmpf ole, %30, %48 : vector<1x256xf32>
    %50 = arith.andi %47, %49 : vector<1x256xi1>
    %51 = arith.extui %50 : vector<1x256xi1> to vector<1x256xi32>
    %52 = arith.sitofp %51 : vector<1x256xi32> to vector<1x256xf32>
    %cst_21 = arith.constant 0.000000e+00 : f32
    %53 = vector.broadcast %cst_21 : f32 to vector<1x256xf32>
    %54 = arith.cmpf oge, %28, %53 : vector<1x256xf32>
    %cst_22 = arith.constant 1.500000e+01 : f32
    %55 = vector.broadcast %cst_22 : f32 to vector<1x256xf32>
    %56 = arith.cmpf ole, %28, %55 : vector<1x256xf32>
    %57 = arith.andi %54, %56 : vector<1x256xi1>
    %58 = arith.extui %57 : vector<1x256xi1> to vector<1x256xi32>
    %59 = arith.sitofp %58 : vector<1x256xi32> to vector<1x256xf32>
    %cst_23 = arith.constant 0.000000e+00 : f32
    %60 = vector.broadcast %cst_23 : f32 to vector<1x256xf32>
    %61 = arith.cmpf oge, %32, %60 : vector<1x256xf32>
    %cst_24 = arith.constant 1.500000e+01 : f32
    %62 = vector.broadcast %cst_24 : f32 to vector<1x256xf32>
    %63 = arith.cmpf ole, %32, %62 : vector<1x256xf32>
    %64 = arith.andi %61, %63 : vector<1x256xi1>
    %65 = arith.extui %64 : vector<1x256xi1> to vector<1x256xi32>
    %66 = arith.sitofp %65 : vector<1x256xi32> to vector<1x256xf32>
    %67 = arith.mulf %38, %35 : vector<1x256xf32>
    %68 = arith.mulf %67, %59 : vector<1x256xf32>
    %69 = arith.mulf %68, %45 : vector<1x256xf32>
    %70 = arith.mulf %38, %33 : vector<1x256xf32>
    %71 = arith.mulf %70, %59 : vector<1x256xf32>
    %72 = arith.mulf %71, %52 : vector<1x256xf32>
    %73 = arith.addf %69, %72 : vector<1x256xf32>
    %74 = arith.mulf %36, %35 : vector<1x256xf32>
    %75 = arith.mulf %74, %66 : vector<1x256xf32>
    %76 = arith.mulf %75, %45 : vector<1x256xf32>
    %77 = arith.addf %73, %76 : vector<1x256xf32>
    %78 = arith.mulf %36, %33 : vector<1x256xf32>
    %79 = arith.mulf %78, %66 : vector<1x256xf32>
    %80 = arith.mulf %79, %52 : vector<1x256xf32>
    %81 = arith.addf %77, %80 : vector<1x256xf32>
    %cst_25 = arith.constant 0.999899983 : f32
    %82 = vector.broadcast %cst_25 : f32 to vector<1x256xf32>
    %83 = arith.cmpf oge, %81, %82 : vector<1x256xf32>
    %84 = arith.extui %83 : vector<1x256xi1> to vector<1x256xi32>
    %85 = arith.sitofp %84 : vector<1x256xi32> to vector<1x256xf32>
    %cst_26 = arith.constant 0.000000e+00 : f32
    %cst_27 = arith.constant 1.500000e+01 : f32
    %86 = vector.broadcast %cst_26 : f32 to vector<1x256xf32>
    %87 = arith.maximumf %86, %21 : vector<1x256xf32>
    %88 = vector.broadcast %cst_27 : f32 to vector<1x256xf32>
    %89 = arith.minimumf %88, %87 : vector<1x256xf32>
    %cst_28 = arith.constant 0.000000e+00 : f32
    %cst_29 = arith.constant 1.500000e+01 : f32
    %90 = vector.broadcast %cst_28 : f32 to vector<1x256xf32>
    %91 = arith.maximumf %90, %26 : vector<1x256xf32>
    %92 = vector.broadcast %cst_29 : f32 to vector<1x256xf32>
    %93 = arith.minimumf %92, %91 : vector<1x256xf32>
    %94 = vector.broadcast %89 : vector<1x256xf32> to vector<16x256xf32>
    %95 = arith.subf %3, %94 : vector<16x256xf32>
    %96 = math.absf %95 : vector<16x256xf32>
    %cst_30 = arith.constant 1.000000e+00 : f32
    %97 = vector.broadcast %cst_30 : f32 to vector<16x256xf32>
    %98 = arith.subf %97, %96 : vector<16x256xf32>
    %cst_31 = arith.constant 0.000000e+00 : f32
    %99 = vector.broadcast %cst_31 : f32 to vector<16x256xf32>
    %100 = arith.maximumf %99, %98 : vector<16x256xf32>
    %101 = vector.broadcast %93 : vector<1x256xf32> to vector<16x256xf32>
    %102 = arith.subf %5, %101 : vector<16x256xf32>
    %103 = math.absf %102 : vector<16x256xf32>
    %cst_32 = arith.constant 1.000000e+00 : f32
    %104 = vector.broadcast %cst_32 : f32 to vector<16x256xf32>
    %105 = arith.subf %104, %103 : vector<16x256xf32>
    %cst_33 = arith.constant 0.000000e+00 : f32
    %106 = vector.broadcast %cst_33 : f32 to vector<16x256xf32>
    %107 = arith.maximumf %106, %105 : vector<16x256xf32>
    %c0_34 = arith.constant 0 : index
    %c0_35 = arith.constant 0 : index
    %c0_36 = arith.constant 0 : index
    %108 = vector.load %arg2[%c0_34, %c0_35, %c0_36] : memref<2x48x16xf32, #tpu.memory_space<vmem>>, vector<1x48x16xf32>
    %109 = vector.shape_cast %108 : vector<1x48x16xf32> to vector<48x16xf32>
    %cst_37 = arith.constant 5.000000e-01 : f32
    %110 = vector.broadcast %cst_37 : f32 to vector<48x16xf32>
    %111 = arith.mulf %109, %110 : vector<48x16xf32>
    %cst_38 = arith.constant 5.000000e-01 : f32
    %112 = vector.broadcast %cst_38 : f32 to vector<48x16xf32>
    %113 = arith.addf %111, %112 : vector<48x16xf32>
    %114 = arith.truncf %113 : vector<48x16xf32> to vector<48x16xbf16>
    %115 = arith.truncf %100 : vector<16x256xf32> to vector<16x256xbf16>
    %cst_39 = arith.constant dense<0.000000e+00> : vector<48x256xf32>
    %116 = tpu.matmul %114, %115, %cst_39 {dimension_numbers = #tpu.dot_dimension_numbers<[1], [0], [0], [1], [0, 0, 1, 1], [], []>} : vector<48x16xbf16>, vector<16x256xbf16>, vector<48x256xf32> -> vector<48x256xf32>
    %c0_40 = arith.constant 0 : index
    %c0_41 = arith.constant 0 : index
    %c0_42 = arith.constant 0 : index
    %117 = vector.load %arg3[%c0_40, %c0_41, %c0_42] : memref<2x3x256xf32, #tpu.memory_space<vmem>>, vector<1x3x256xf32>
    %118 = vector.shape_cast %117 : vector<1x3x256xf32> to vector<3x256xf32>
    %cst_43 = arith.constant 5.000000e-01 : f32
    %119 = vector.broadcast %cst_43 : f32 to vector<3x256xf32>
    %120 = arith.mulf %118, %119 : vector<3x256xf32>
    %cst_44 = arith.constant 5.000000e-01 : f32
    %121 = vector.broadcast %cst_44 : f32 to vector<3x256xf32>
    %122 = arith.addf %120, %121 : vector<3x256xf32>
    %123 = vector.extract_strided_slice %116 {offsets = [0, 0], sizes = [16, 256], strides = [1, 1]} : vector<48x256xf32> to vector<16x256xf32>
    %124 = arith.mulf %123, %107 : vector<16x256xf32>
    %cst_45 = arith.constant dense<0.000000e+00> : vector<256xf32>
    %125 = vector.multi_reduction <add>, %124, %cst_45 [0] : vector<16x256xf32> to vector<256xf32>
    %126 = vector.shape_cast %125 : vector<256xf32> to vector<1x256xf32>
    %127 = arith.mulf %126, %85 : vector<1x256xf32>
    %128 = vector.extract_strided_slice %122 {offsets = [0, 0], sizes = [1, 256], strides = [1, 1]} : vector<3x256xf32> to vector<1x256xf32>
    %129 = arith.subf %127, %128 : vector<1x256xf32>
    %130 = math.absf %129 : vector<1x256xf32>
    %131 = arith.addf %7, %130 : vector<1x256xf32>
    %132 = vector.extract_strided_slice %116 {offsets = [16, 0], sizes = [16, 256], strides = [1, 1]} : vector<48x256xf32> to vector<16x256xf32>
    %133 = arith.mulf %132, %107 : vector<16x256xf32>
    %cst_46 = arith.constant dense<0.000000e+00> : vector<256xf32>
    %134 = vector.multi_reduction <add>, %133, %cst_46 [0] : vector<16x256xf32> to vector<256xf32>
    %135 = vector.shape_cast %134 : vector<256xf32> to vector<1x256xf32>
    %136 = arith.mulf %135, %85 : vector<1x256xf32>
    %137 = vector.extract_strided_slice %122 {offsets = [1, 0], sizes = [1, 256], strides = [1, 1]} : vector<3x256xf32> to vector<1x256xf32>
    %138 = arith.subf %136, %137 : vector<1x256xf32>
    %139 = math.absf %138 : vector<1x256xf32>
    %140 = arith.addf %131, %139 : vector<1x256xf32>
    %141 = vector.extract_strided_slice %116 {offsets = [32, 0], sizes = [16, 256], strides = [1, 1]} : vector<48x256xf32> to vector<16x256xf32>
    %142 = arith.mulf %141, %107 : vector<16x256xf32>
    %cst_47 = arith.constant dense<0.000000e+00> : vector<256xf32>
    %143 = vector.multi_reduction <add>, %142, %cst_47 [0] : vector<16x256xf32> to vector<256xf32>
    %144 = vector.shape_cast %143 : vector<256xf32> to vector<1x256xf32>
    %145 = arith.mulf %144, %85 : vector<1x256xf32>
    %146 = vector.extract_strided_slice %122 {offsets = [2, 0], sizes = [1, 256], strides = [1, 1]} : vector<3x256xf32> to vector<1x256xf32>
    %147 = arith.subf %145, %146 : vector<1x256xf32>
    %148 = math.absf %147 : vector<1x256xf32>
    %149 = arith.addf %140, %148 : vector<1x256xf32>
    %c1_48 = arith.constant 1 : index
    %c0_49 = arith.constant 0 : index
    %c0_50 = arith.constant 0 : index
    %150 = vector.load %arg4[%c1_48, %c0_49, %c0_50] : memref<2x2x256xf32, #tpu.memory_space<vmem>>, vector<1x2x256xf32>
    %151 = vector.shape_cast %150 : vector<1x2x256xf32> to vector<2x256xf32>
    %c1_51 = arith.constant 1 : index
    %c0_52 = arith.constant 0 : index
    %c0_53 = arith.constant 0 : index
    %152 = vector.load %arg5[%c1_51, %c0_52, %c0_53] : memref<2x2x256xf32, #tpu.memory_space<vmem>>, vector<1x2x256xf32>
    %153 = vector.shape_cast %152 : vector<1x2x256xf32> to vector<2x256xf32>
    %154 = arith.subf %151, %153 : vector<2x256xf32>
    %155 = math.absf %154 : vector<2x256xf32>
    %156 = arith.addf %14, %155 : vector<2x256xf32>
    %157 = vector.extract_strided_slice %151 {offsets = [0, 0], sizes = [1, 256], strides = [1, 1]} : vector<2x256xf32> to vector<1x256xf32>
    %158 = vector.extract_strided_slice %151 {offsets = [1, 0], sizes = [1, 256], strides = [1, 1]} : vector<2x256xf32> to vector<1x256xf32>
    %159 = arith.addf %0, %157 : vector<1x256xf32>
    %cst_54 = arith.constant 1.06666672 : f32
    %160 = vector.broadcast %cst_54 : f32 to vector<1x256xf32>
    %161 = arith.mulf %159, %160 : vector<1x256xf32>
    %cst_55 = arith.constant 5.000000e-01 : f32
    %162 = vector.broadcast %cst_55 : f32 to vector<1x256xf32>
    %163 = arith.subf %161, %162 : vector<1x256xf32>
    %164 = arith.addf %1, %158 : vector<1x256xf32>
    %cst_56 = arith.constant 1.06666672 : f32
    %165 = vector.broadcast %cst_56 : f32 to vector<1x256xf32>
    %166 = arith.mulf %164, %165 : vector<1x256xf32>
    %cst_57 = arith.constant 5.000000e-01 : f32
    %167 = vector.broadcast %cst_57 : f32 to vector<1x256xf32>
    %168 = arith.subf %166, %167 : vector<1x256xf32>
    %169 = math.floor %163 : vector<1x256xf32>
    %170 = math.floor %168 : vector<1x256xf32>
    %cst_58 = arith.constant 1.000000e+00 : f32
    %171 = vector.broadcast %cst_58 : f32 to vector<1x256xf32>
    %172 = arith.addf %169, %171 : vector<1x256xf32>
    %cst_59 = arith.constant 1.000000e+00 : f32
    %173 = vector.broadcast %cst_59 : f32 to vector<1x256xf32>
    %174 = arith.addf %170, %173 : vector<1x256xf32>
    %175 = arith.subf %163, %169 : vector<1x256xf32>
    %cst_60 = arith.constant 1.000000e+00 : f32
    %176 = vector.broadcast %cst_60 : f32 to vector<1x256xf32>
    %177 = arith.subf %176, %175 : vector<1x256xf32>
    %178 = arith.subf %168, %170 : vector<1x256xf32>
    %cst_61 = arith.constant 1.000000e+00 : f32
    %179 = vector.broadcast %cst_61 : f32 to vector<1x256xf32>
    %180 = arith.subf %179, %178 : vector<1x256xf32>
    %cst_62 = arith.constant 0.000000e+00 : f32
    %181 = vector.broadcast %cst_62 : f32 to vector<1x256xf32>
    %182 = arith.cmpf oge, %169, %181 : vector<1x256xf32>
    %cst_63 = arith.constant 1.500000e+01 : f32
    %183 = vector.broadcast %cst_63 : f32 to vector<1x256xf32>
    %184 = arith.cmpf ole, %169, %183 : vector<1x256xf32>
    %185 = arith.andi %182, %184 : vector<1x256xi1>
    %186 = arith.extui %185 : vector<1x256xi1> to vector<1x256xi32>
    %187 = arith.sitofp %186 : vector<1x256xi32> to vector<1x256xf32>
    %cst_64 = arith.constant 0.000000e+00 : f32
    %188 = vector.broadcast %cst_64 : f32 to vector<1x256xf32>
    %189 = arith.cmpf oge, %172, %188 : vector<1x256xf32>
    %cst_65 = arith.constant 1.500000e+01 : f32
    %190 = vector.broadcast %cst_65 : f32 to vector<1x256xf32>
    %191 = arith.cmpf ole, %172, %190 : vector<1x256xf32>
    %192 = arith.andi %189, %191 : vector<1x256xi1>
    %193 = arith.extui %192 : vector<1x256xi1> to vector<1x256xi32>
    %194 = arith.sitofp %193 : vector<1x256xi32> to vector<1x256xf32>
    %cst_66 = arith.constant 0.000000e+00 : f32
    %195 = vector.broadcast %cst_66 : f32 to vector<1x256xf32>
    %196 = arith.cmpf oge, %170, %195 : vector<1x256xf32>
    %cst_67 = arith.constant 1.500000e+01 : f32
    %197 = vector.broadcast %cst_67 : f32 to vector<1x256xf32>
    %198 = arith.cmpf ole, %170, %197 : vector<1x256xf32>
    %199 = arith.andi %196, %198 : vector<1x256xi1>
    %200 = arith.extui %199 : vector<1x256xi1> to vector<1x256xi32>
    %201 = arith.sitofp %200 : vector<1x256xi32> to vector<1x256xf32>
    %cst_68 = arith.constant 0.000000e+00 : f32
    %202 = vector.broadcast %cst_68 : f32 to vector<1x256xf32>
    %203 = arith.cmpf oge, %174, %202 : vector<1x256xf32>
    %cst_69 = arith.constant 1.500000e+01 : f32
    %204 = vector.broadcast %cst_69 : f32 to vector<1x256xf32>
    %205 = arith.cmpf ole, %174, %204 : vector<1x256xf32>
    %206 = arith.andi %203, %205 : vector<1x256xi1>
    %207 = arith.extui %206 : vector<1x256xi1> to vector<1x256xi32>
    %208 = arith.sitofp %207 : vector<1x256xi32> to vector<1x256xf32>
    %209 = arith.mulf %180, %177 : vector<1x256xf32>
    %210 = arith.mulf %209, %201 : vector<1x256xf32>
    %211 = arith.mulf %210, %187 : vector<1x256xf32>
    %212 = arith.mulf %180, %175 : vector<1x256xf32>
    %213 = arith.mulf %212, %201 : vector<1x256xf32>
    %214 = arith.mulf %213, %194 : vector<1x256xf32>
    %215 = arith.addf %211, %214 : vector<1x256xf32>
    %216 = arith.mulf %178, %177 : vector<1x256xf32>
    %217 = arith.mulf %216, %208 : vector<1x256xf32>
    %218 = arith.mulf %217, %187 : vector<1x256xf32>
    %219 = arith.addf %215, %218 : vector<1x256xf32>
    %220 = arith.mulf %178, %175 : vector<1x256xf32>
    %221 = arith.mulf %220, %208 : vector<1x256xf32>
    %222 = arith.mulf %221, %194 : vector<1x256xf32>
    %223 = arith.addf %219, %222 : vector<1x256xf32>
    %cst_70 = arith.constant 0.999899983 : f32
    %224 = vector.broadcast %cst_70 : f32 to vector<1x256xf32>
    %225 = arith.cmpf oge, %223, %224 : vector<1x256xf32>
    %226 = arith.extui %225 : vector<1x256xi1> to vector<1x256xi32>
    %227 = arith.sitofp %226 : vector<1x256xi32> to vector<1x256xf32>
    %cst_71 = arith.constant 0.000000e+00 : f32
    %cst_72 = arith.constant 1.500000e+01 : f32
    %228 = vector.broadcast %cst_71 : f32 to vector<1x256xf32>
    %229 = arith.maximumf %228, %163 : vector<1x256xf32>
    %230 = vector.broadcast %cst_72 : f32 to vector<1x256xf32>
    %231 = arith.minimumf %230, %229 : vector<1x256xf32>
    %cst_73 = arith.constant 0.000000e+00 : f32
    %cst_74 = arith.constant 1.500000e+01 : f32
    %232 = vector.broadcast %cst_73 : f32 to vector<1x256xf32>
    %233 = arith.maximumf %232, %168 : vector<1x256xf32>
    %234 = vector.broadcast %cst_74 : f32 to vector<1x256xf32>
    %235 = arith.minimumf %234, %233 : vector<1x256xf32>
    %236 = vector.broadcast %231 : vector<1x256xf32> to vector<16x256xf32>
    %237 = arith.subf %3, %236 : vector<16x256xf32>
    %238 = math.absf %237 : vector<16x256xf32>
    %cst_75 = arith.constant 1.000000e+00 : f32
    %239 = vector.broadcast %cst_75 : f32 to vector<16x256xf32>
    %240 = arith.subf %239, %238 : vector<16x256xf32>
    %cst_76 = arith.constant 0.000000e+00 : f32
    %241 = vector.broadcast %cst_76 : f32 to vector<16x256xf32>
    %242 = arith.maximumf %241, %240 : vector<16x256xf32>
    %243 = vector.broadcast %235 : vector<1x256xf32> to vector<16x256xf32>
    %244 = arith.subf %5, %243 : vector<16x256xf32>
    %245 = math.absf %244 : vector<16x256xf32>
    %cst_77 = arith.constant 1.000000e+00 : f32
    %246 = vector.broadcast %cst_77 : f32 to vector<16x256xf32>
    %247 = arith.subf %246, %245 : vector<16x256xf32>
    %cst_78 = arith.constant 0.000000e+00 : f32
    %248 = vector.broadcast %cst_78 : f32 to vector<16x256xf32>
    %249 = arith.maximumf %248, %247 : vector<16x256xf32>
    %c1_79 = arith.constant 1 : index
    %c0_80 = arith.constant 0 : index
    %c0_81 = arith.constant 0 : index
    %250 = vector.load %arg2[%c1_79, %c0_80, %c0_81] : memref<2x48x16xf32, #tpu.memory_space<vmem>>, vector<1x48x16xf32>
    %251 = vector.shape_cast %250 : vector<1x48x16xf32> to vector<48x16xf32>
    %cst_82 = arith.constant 5.000000e-01 : f32
    %252 = vector.broadcast %cst_82 : f32 to vector<48x16xf32>
    %253 = arith.mulf %251, %252 : vector<48x16xf32>
    %cst_83 = arith.constant 5.000000e-01 : f32
    %254 = vector.broadcast %cst_83 : f32 to vector<48x16xf32>
    %255 = arith.addf %253, %254 : vector<48x16xf32>
    %256 = arith.truncf %255 : vector<48x16xf32> to vector<48x16xbf16>
    %257 = arith.truncf %242 : vector<16x256xf32> to vector<16x256xbf16>
    %cst_84 = arith.constant dense<0.000000e+00> : vector<48x256xf32>
    %258 = tpu.matmul %256, %257, %cst_84 {dimension_numbers = #tpu.dot_dimension_numbers<[1], [0], [0], [1], [0, 0, 1, 1], [], []>} : vector<48x16xbf16>, vector<16x256xbf16>, vector<48x256xf32> -> vector<48x256xf32>
    %c1_85 = arith.constant 1 : index
    %c0_86 = arith.constant 0 : index
    %c0_87 = arith.constant 0 : index
    %259 = vector.load %arg3[%c1_85, %c0_86, %c0_87] : memref<2x3x256xf32, #tpu.memory_space<vmem>>, vector<1x3x256xf32>
    %260 = vector.shape_cast %259 : vector<1x3x256xf32> to vector<3x256xf32>
    %cst_88 = arith.constant 5.000000e-01 : f32
    %261 = vector.broadcast %cst_88 : f32 to vector<3x256xf32>
    %262 = arith.mulf %260, %261 : vector<3x256xf32>
    %cst_89 = arith.constant 5.000000e-01 : f32
    %263 = vector.broadcast %cst_89 : f32 to vector<3x256xf32>
    %264 = arith.addf %262, %263 : vector<3x256xf32>
    %265 = vector.extract_strided_slice %258 {offsets = [0, 0], sizes = [16, 256], strides = [1, 1]} : vector<48x256xf32> to vector<16x256xf32>
    %266 = arith.mulf %265, %249 : vector<16x256xf32>
    %cst_90 = arith.constant dense<0.000000e+00> : vector<256xf32>
    %267 = vector.multi_reduction <add>, %266, %cst_90 [0] : vector<16x256xf32> to vector<256xf32>
    %268 = vector.shape_cast %267 : vector<256xf32> to vector<1x256xf32>
    %269 = arith.mulf %268, %227 : vector<1x256xf32>
    %270 = vector.extract_strided_slice %264 {offsets = [0, 0], sizes = [1, 256], strides = [1, 1]} : vector<3x256xf32> to vector<1x256xf32>
    %271 = arith.subf %269, %270 : vector<1x256xf32>
    %272 = math.absf %271 : vector<1x256xf32>
    %273 = arith.addf %149, %272 : vector<1x256xf32>
    %274 = vector.extract_strided_slice %258 {offsets = [16, 0], sizes = [16, 256], strides = [1, 1]} : vector<48x256xf32> to vector<16x256xf32>
    %275 = arith.mulf %274, %249 : vector<16x256xf32>
    %cst_91 = arith.constant dense<0.000000e+00> : vector<256xf32>
    %276 = vector.multi_reduction <add>, %275, %cst_91 [0] : vector<16x256xf32> to vector<256xf32>
    %277 = vector.shape_cast %276 : vector<256xf32> to vector<1x256xf32>
    %278 = arith.mulf %277, %227 : vector<1x256xf32>
    %279 = vector.extract_strided_slice %264 {offsets = [1, 0], sizes = [1, 256], strides = [1, 1]} : vector<3x256xf32> to vector<1x256xf32>
    %280 = arith.subf %278, %279 : vector<1x256xf32>
    %281 = math.absf %280 : vector<1x256xf32>
    %282 = arith.addf %273, %281 : vector<1x256xf32>
    %283 = vector.extract_strided_slice %258 {offsets = [32, 0], sizes = [16, 256], strides = [1, 1]} : vector<48x256xf32> to vector<16x256xf32>
    %284 = arith.mulf %283, %249 : vector<16x256xf32>
    %cst_92 = arith.constant dense<0.000000e+00> : vector<256xf32>
    %285 = vector.multi_reduction <add>, %284, %cst_92 [0] : vector<16x256xf32> to vector<256xf32>
    %286 = vector.shape_cast %285 : vector<256xf32> to vector<1x256xf32>
    %287 = arith.mulf %286, %227 : vector<1x256xf32>
    %288 = vector.extract_strided_slice %264 {offsets = [2, 0], sizes = [1, 256], strides = [1, 1]} : vector<3x256xf32> to vector<1x256xf32>
    %289 = arith.subf %287, %288 : vector<1x256xf32>
    %290 = math.absf %289 : vector<1x256xf32>
    %291 = arith.addf %282, %290 : vector<1x256xf32>
    %292 = vector.shape_cast %156 : vector<2x256xf32> to vector<1x2x256xf32>
    %cst_93 = arith.constant dense<0.000000e+00> : vector<1xf32>
    %293 = vector.multi_reduction <add>, %292, %cst_93 [1, 2] : vector<1x2x256xf32> to vector<1xf32>
    %294 = vector.shape_cast %293 : vector<1xf32> to vector<1x1x1xf32>
    %295 = vector.extract %294[0, 0, 0] : f32 from vector<1x1x1xf32>
    %296 = vector.shape_cast %291 : vector<1x256xf32> to vector<1x1x256xf32>
    %cst_94 = arith.constant dense<0.000000e+00> : vector<1xf32>
    %297 = vector.multi_reduction <add>, %296, %cst_94 [1, 2] : vector<1x1x256xf32> to vector<1xf32>
    %298 = vector.shape_cast %297 : vector<1xf32> to vector<1x1x1xf32>
    %299 = vector.extract %298[0, 0, 0] : f32 from vector<1x1x1xf32>
    %300 = tpu.iota {dimensions = array<i32: 1>} : vector<1x8x128xi32>
    %301 = tpu.iota {dimensions = array<i32: 2>} : vector<1x8x128xi32>
    %c0_i32 = arith.constant 0 : i32
    %302 = vector.broadcast %c0_i32 : i32 to vector<1x8x128xi32>
    %303 = arith.cmpi eq, %300, %302 : vector<1x8x128xi32>
    %c0_i32_95 = arith.constant 0 : i32
    %304 = vector.broadcast %c0_i32_95 : i32 to vector<1x8x128xi32>
    %305 = arith.cmpi eq, %301, %304 : vector<1x8x128xi32>
    %306 = arith.andi %303, %305 : vector<1x8x128xi1>
    %cst_96 = arith.constant 0.000000e+00 : f32
    %307 = vector.broadcast %295 : f32 to vector<1x8x128xf32>
    %308 = vector.broadcast %cst_96 : f32 to vector<1x8x128xf32>
    %309 = arith.select %306, %307, %308 : vector<1x8x128xi1>, vector<1x8x128xf32>
    %c0_i32_97 = arith.constant 0 : i32
    %310 = vector.broadcast %c0_i32_97 : i32 to vector<1x8x128xi32>
    %311 = arith.cmpi eq, %300, %310 : vector<1x8x128xi32>
    %c1_i32 = arith.constant 1 : i32
    %312 = vector.broadcast %c1_i32 : i32 to vector<1x8x128xi32>
    %313 = arith.cmpi eq, %301, %312 : vector<1x8x128xi32>
    %314 = arith.andi %311, %313 : vector<1x8x128xi1>
    %cst_98 = arith.constant 0.000000e+00 : f32
    %315 = vector.broadcast %299 : f32 to vector<1x8x128xf32>
    %316 = vector.broadcast %cst_98 : f32 to vector<1x8x128xf32>
    %317 = arith.select %314, %315, %316 : vector<1x8x128xi1>, vector<1x8x128xf32>
    %318 = arith.addf %309, %317 : vector<1x8x128xf32>
    %c0_99 = arith.constant 0 : index
    %c0_100 = arith.constant 0 : index
    %c0_101 = arith.constant 0 : index
    %319 = vector.load %arg6[%c0_99, %c0_100, %c0_101] : memref<1x8x128xf32, #tpu.memory_space<vmem>>, vector<1x8x128xf32>
    tpu.vector_store %arg6[%c0_99, %c0_100, %c0_101], %318 {strides = array<i32>} : memref<1x8x128xf32, #tpu.memory_space<vmem>>, vector<1x8x128xf32>,
    return
  }
  func.func @transform_0(%arg0: i32) -> (i32, i32) {
    %c0_i32 = arith.constant 0 : i32
    %c0_i32_0 = arith.constant 0 : i32
    return %c0_i32, %arg0 : i32, i32
  }
  func.func @transform_1(%arg0: i32) -> (i32, i32, i32) {
    %c0_i32 = arith.constant 0 : i32
    %c0_i32_0 = arith.constant 0 : i32
    %c0_i32_1 = arith.constant 0 : i32
    %c0_i32_2 = arith.constant 0 : i32
    return %c0_i32, %c0_i32_0, %c0_i32_1 : i32, i32, i32
  }
  func.func @transform_2(%arg0: i32) -> (i32, i32, i32) {
    %c0_i32 = arith.constant 0 : i32
    %c0_i32_0 = arith.constant 0 : i32
    %c0_i32_1 = arith.constant 0 : i32
    return %c0_i32, %c0_i32_0, %arg0 : i32, i32, i32
  }
  func.func @transform_3(%arg0: i32) -> (i32, i32, i32) {
    %c0_i32 = arith.constant 0 : i32
    %c0_i32_0 = arith.constant 0 : i32
    %c0_i32_1 = arith.constant 0 : i32
    return %c0_i32, %c0_i32_0, %arg0 : i32, i32, i32
  }
  func.func @transform_4(%arg0: i32) -> (i32, i32, i32) {
    %c0_i32 = arith.constant 0 : i32
    %c0_i32_0 = arith.constant 0 : i32
    %c0_i32_1 = arith.constant 0 : i32
    return %c0_i32, %c0_i32_0, %arg0 : i32, i32, i32
  }
  func.func @transform_5(%arg0: i32) -> (i32, i32, i32) {
    %c0_i32 = arith.constant 0 : i32
    %c0_i32_0 = arith.constant 0 : i32
    %c0_i32_1 = arith.constant 0 : i32
    return %arg0, %c0_i32, %c0_i32_0 : i32, i32, i32
  }
}

</mosaic_0001>

<llo_original>
// kernel: tpu_custom_call.1
$region0: #{tpu_custom_call.1}
  #allocation0 [shape = 'u32[]', space=smem, size = 0x4, offset = 0x4, fixed_abs, tag = 'smem constant byte address 0x4 - core index']
  #allocation1 [shape = 'u32[144,128]{1,0:T(1,128)}', space=vmem, size = 0x12000, scoped, tag = 'internal scratch']
  %s0 = inlined_call_operand.vmem [shape: f32[2,256], index: 0, kind: input, shape index: {}]
  %s1 = inlined_call_operand.vmem [shape: f32[2,48,16], index: 1, kind: input, shape index: {}]
  %s2 = inlined_call_operand.vmem [shape: f32[2,3,256], index: 2, kind: input, shape index: {}]
  %s3 = inlined_call_operand.vmem [shape: f32[2,2,256], index: 3, kind: input, shape index: {}]
  %s4 = inlined_call_operand.vmem [shape: f32[2,2,256], index: 4, kind: input, shape index: {}]
  %s5 = inlined_call_operand.hbm [shape: f32[1,8,128], index: 5, kind: output, shape index: {}]
  %s6 = sld [smem:[#allocation0]]
  $region30: #{tpu_custom_call.1} parent=0
    _
  %s8 = ssub.s32 1, %s6
  %s9 = scalar_select 0, %s8, %s6
  $region1: #{tpu_custom_call.1} parent=0
    #allocation2 [shape = 'u8[4096]{0}', space=vmem, size = 0x1000, scoped, tag = 'output window, operand 0, single buffered']
    #allocation3 [shape = 's32[1]{0}', space=sflag, size = 0x4, scoped, tag = 'scoped memory for tpu_custom_call.1']
    %10 = vsyncpa [#allocation3], 0
    // Predicated region
    $region2: #{tpu_custom_call.1} parent=1 // pred_check
      _
    $region3: #{tpu_custom_call.1} parent=1 // pred_check_branch
      %12 = sbr.rel (0) target = $region5
    $region4: #{tpu_custom_call.1} parent=1 // pred_region
      _
    $region5: #{tpu_custom_call.1} parent=1 // pred_fallthru
      _
    // Predicated region
    $region6: #{tpu_custom_call.1} parent=1 // pred_check
      _
    $region7: #{tpu_custom_call.1} parent=1 // pred_check_branch
      %14 = sbr.rel (0) target = $region9
    $region8: #{tpu_custom_call.1} parent=1 // pred_region
      _
    $region9: #{tpu_custom_call.1} parent=1 // pred_fallthru
      _
    // Predicated region
    $region10: #{tpu_custom_call.1} parent=1 // pred_check
      _
    $region11: #{tpu_custom_call.1} parent=1 // pred_check_branch
      %16 = sbr.rel (0) target = $region13
    $region12: #{tpu_custom_call.1} parent=1 // pred_region
      _
    $region13: #{tpu_custom_call.1} parent=1 // pred_fallthru
      _
    // Predicated region
    $region14: #{tpu_custom_call.1} parent=1 // pred_check
      _
    $region15: #{tpu_custom_call.1} parent=1 // pred_check_branch
      %18 = sbr.rel (0) target = $region17
    $region16: #{tpu_custom_call.1} parent=1 // pred_region
      _
    $region17: #{tpu_custom_call.1} parent=1 // pred_fallthru
      _
    // Predicated region
    $region18: #{tpu_custom_call.1} parent=1 // pred_check
      _
    $region19: #{tpu_custom_call.1} parent=1 // pred_check_branch
      %20 = sbr.rel (0) target = $region21
    $region20: #{tpu_custom_call.1} parent=1 // pred_region
      _
    $region21: #{tpu_custom_call.1} parent=1 // pred_fallthru
      _
    %v22 = vld [vmem:[%s0] ss:$2 sm:$0x3]
    %s23 = scalar_lea.vmem %s0, 1
    %v24 = vld [vmem:[%s23] ss:$2 sm:$0x3]
    %v25 = vlaneseq
    %v26 = vshrl.u32 %v25, 7
    %v27 = vadd.s32 %v26, 8
    %v28 = vcvt.s32.f32 %v26
    %v29 = vcvt.s32.f32 %v27
    %v30 = vld [vmem:[%s3] sm:$0xf]
    %v31 = vld [vmem:[%s4] sm:$0xf]
    %v32 = vsub.f32 %v30, %v31
    %v33 = vand.u32 2147483647, %v32
    %v34 = vadd.f32 %v33, 0.0
    %v37 = vunpack.c.l.s4 1966171168
    %v38 = vunpack.c.0.s8 %v37
    %v39 = vlaneseq
    %v40 = vshrl.u32 %v39, 7
    %v41 = vsub.s32 %v38, %v40
    %v42 = vrot.slane %v30, %v41
    %v44 = vadd.f32 %v22, %v42
    %v45 = vmul.f32 %v44, 1.0666667
    %v46 = vsub.f32 %v45, 0.5
    %v47 = vcombine.high %v42, %v42
    %v49 = vadd.f32 %v24, %v47
    %v50 = vmul.f32 %v49, 1.0666667
    %v51 = vsub.f32 %v50, 0.5
    %v52 = vfloor.f32 %v46
    %v53 = vfloor.f32 %v51
    %v54 = vadd.f32 %v52, 1.0
    %v55 = vadd.f32 %v53, 1.0
    %v56 = vsub.f32 %v46, %v52
    %v57 = vsub.f32 1.0, %v56
    %v58 = vsub.f32 %v51, %v53
    %v59 = vsub.f32 1.0, %v58
    %vm60 = vcmp.ge.f32.partialorder %v52, 0.0
    %vm61 = vcmp.le.f32.partialorder %v52, 15.0
    %vm62 = vmand %vm60, %vm61
    %v63 = vsel %vm62, 1, 0
    %v64 = vcvt.s32.f32 %v63
    %vm65 = vcmp.ge.f32.partialorder %v54, 0.0
    %vm66 = vcmp.le.f32.partialorder %v54, 15.0
    %vm67 = vmand %vm65, %vm66
    %v68 = vsel %vm67, 1, 0
    %v69 = vcvt.s32.f32 %v68
    %vm70 = vcmp.ge.f32.partialorder %v53, 0.0
    %vm71 = vcmp.le.f32.partialorder %v53, 15.0
    %vm72 = vmand %vm70, %vm71
    %v73 = vsel %vm72, 1, 0
    %v74 = vcvt.s32.f32 %v73
    %vm75 = vcmp.ge.f32.partialorder %v55, 0.0
    %vm76 = vcmp.le.f32.partialorder %v55, 15.0
    %vm77 = vmand %vm75, %vm76
    %v78 = vsel %vm77, 1, 0
    %v79 = vcvt.s32.f32 %v78
    %v80 = vmul.f32 %v59, %v57
    %v81 = vmul.f32 %v80, %v74
    %v82 = vmul.f32 %v81, %v64
    %v83 = vmul.f32 %v59, %v56
    %v84 = vmul.f32 %v83, %v74
    %v85 = vmul.f32 %v84, %v69
    %v86 = vadd.f32 %v82, %v85
    %v87 = vmul.f32 %v58, %v57
    %v88 = vmul.f32 %v87, %v79
    %v89 = vmul.f32 %v88, %v64
    %v90 = vadd.f32 %v86, %v89
    %v91 = vmul.f32 %v58, %v56
    %v92 = vmul.f32 %v91, %v79
    %v93 = vmul.f32 %v92, %v69
    %v94 = vadd.f32 %v90, %v93
    %vm95 = vcmp.ge.f32.partialorder %v94, 0.9999
    %v96 = vsel %vm95, 1, 0
    %v97 = vcvt.s32.f32 %v96
    %v98 = vmax.f32 %v46, 0.0
    %v99 = vmin.f32 %v98, 15.0
    %v100 = vmax.f32 %v51, 0.0
    %v101 = vmin.f32 %v100, 15.0
    %v103 = vlaneseq
    %v104 = vshrl.u32 %v103, 7
    %v105 = vsub.s32 0, %v104
    %v106 = vrot.slane %v99, %v105
    %v107 = vlaneseq
    %v108 = vshrl.u32 %v107, 7
    %v109 = vsub.s32 1, %v108
    %v110 = vrot.slane %v99, %v109
    %v113 = vsub.f32 %v28, %v106
    %v114 = vsub.f32 %v28, %v110
    %v115 = vsub.f32 %v29, %v106
    %v116 = vsub.f32 %v29, %v110
    %v117 = vand.u32 2147483647, %v113
    %v118 = vand.u32 2147483647, %v114
    %v119 = vand.u32 2147483647, %v115
    %v120 = vand.u32 2147483647, %v116
    %v121 = vsub.f32 1.0, %v117
    %v122 = vsub.f32 1.0, %v118
    %v123 = vsub.f32 1.0, %v119
    %v124 = vsub.f32 1.0, %v120
    %v125 = vmax.f32 %v121, 0.0
    %v126 = vmax.f32 %v122, 0.0
    %v127 = vmax.f32 %v123, 0.0
    %v128 = vmax.f32 %v124, 0.0
    %v130 = vlaneseq
    %v131 = vshrl.u32 %v130, 7
    %v132 = vsub.s32 0, %v131
    %v133 = vrot.slane %v101, %v132
    %v134 = vlaneseq
    %v135 = vshrl.u32 %v134, 7
    %v136 = vsub.s32 1, %v135
    %v137 = vrot.slane %v101, %v136
    %v140 = vsub.f32 %v28, %v133
    %v141 = vsub.f32 %v28, %v137
    %v142 = vsub.f32 %v29, %v133
    %v143 = vsub.f32 %v29, %v137
    %v144 = vand.u32 2147483647, %v140
    %v145 = vand.u32 2147483647, %v141
    %v146 = vand.u32 2147483647, %v142
    %v147 = vand.u32 2147483647, %v143
    %v148 = vsub.f32 1.0, %v144
    %v149 = vsub.f32 1.0, %v145
    %v150 = vsub.f32 1.0, %v146
    %v151 = vsub.f32 1.0, %v147
    %v152 = vmax.f32 %v148, 0.0
    %v153 = vmax.f32 %v149, 0.0
    %v154 = vmax.f32 %v150, 0.0
    %v155 = vmax.f32 %v151, 0.0
    %v156 = vld [vmem:[%s1] sm:$0xff]
    %v157 = vld [vmem:[%s1 + $0x8] sm:$0xff]
    %v158 = vld [vmem:[%s1 + $0x10] sm:$0xff]
    %v159 = vld [vmem:[%s1 + $0x18] sm:$0xff]
    %v160 = vld [vmem:[%s1 + $0x20] sm:$0xff]
    %v161 = vld [vmem:[%s1 + $0x28] sm:$0xff]
    %v162 = vmul.f32 %v156, 0.5
    %v163 = vmul.f32 %v157, 0.5
    %v164 = vmul.f32 %v158, 0.5
    %v165 = vmul.f32 %v159, 0.5
    %v166 = vmul.f32 %v160, 0.5
    %v167 = vmul.f32 %v161, 0.5
    %v168 = vadd.f32 %v162, 0.5
    %v169 = vadd.f32 %v163, 0.5
    %v170 = vadd.f32 %v164, 0.5
    %v171 = vadd.f32 %v165, 0.5
    %v172 = vadd.f32 %v166, 0.5
    %v173 = vadd.f32 %v167, 0.5
    %v174 = vpack.c.bf16 %v169, %v168
    %v175 = vpack.c.bf16 %v171, %v170
    %v176 = vpack.c.bf16 %v173, %v172
    %v177 = vpack.c.bf16 %v127, %v125
    %v178 = vpack.c.bf16 %v128, %v126
    %vm179 = vcmask 130048
    %v181 = vsel %vm179, %v174, 0
    %v184 = vsel %vm179, %v175, 0
    %v187 = vsel %vm179, %v176, 0
    %189 = vmatprep.subr.bf16.mxu0 %v178
    %190 = vmatpush1.bf16.msra.mxu0 %v177
    %191 = vmatprep.subr.bf16.mxu0 0
    %192 = vmatpush1.bf16.msra.mxu0 0
    %193 = vmatprep.subr.bf16.mxu0 0
    %194 = vmatpush1.bf16.msra.mxu0 0
    %195 = vmatprep.subr.bf16.mxu0 0
    %196 = vmatpush1.bf16.msra.mxu0 0
    %197 = vmatprep.subr.bf16.mxu0 0
    %198 = vmatpush1.bf16.msra.mxu0 0
    %199 = vmatprep.subr.bf16.mxu0 0
    %200 = vmatpush1.bf16.msra.mxu0 0
    %201 = vmatprep.subr.bf16.mxu0 0
    %202 = vmatpush1.bf16.msra.mxu0 0
    %203 = vmatprep.subr.bf16.mxu0 0
    %204 = vmatpush1.bf16.msra.mxu0 0
    %205 = vmatprep.subr.bf16.mxu0 0
    %206 = vmatpush1.bf16.msra.mxu0 0
    %207 = vmatprep.subr.bf16.mxu0 0
    %208 = vmatpush1.bf16.msra.mxu0 0
    %209 = vmatprep.subr.bf16.mxu0 0
    %210 = vmatpush1.bf16.msra.mxu0 0
    %211 = vmatprep.subr.bf16.mxu0 0
    %212 = vmatpush1.bf16.msra.mxu0 0
    %213 = vmatprep.subr.bf16.mxu0 0
    %214 = vmatpush1.bf16.msra.mxu0 0
    %215 = vmatprep.subr.bf16.mxu0 0
    %216 = vmatpush1.bf16.msra.mxu0 0
    %217 = vmatprep.subr.bf16.mxu0 0
    %218 = vmatpush1.bf16.msra.mxu0 0
    %219 = vmatprep.subr.bf16.mxu0 0
    %220 = vmatpush1.bf16.msra.mxu0 0
    %221 = vmatprep.mubr.bf16.mxu0 0
    %222 = vmatmul.mubr.bf16.gmra.mrb[0].mxu0 %v181
    %v223 = vpop.f32.mrb[0].mxu0
    %v224 = vadd.f32 0.0, %v223
    %v225 = vpop.f32.mrb[0].mxu0
    %v226 = vadd.f32 0.0, %v225
    %v227 = vpop.f32.mrb[0].mxu0
    %v228 = vadd.f32 0.0, %v227
    %v229 = vpop.f32.mrb[0].mxu0
    %v230 = vadd.f32 0.0, %v229
    %231 = vmatprep.mubr.bf16.mxu0 0
    %232 = vmatmul.mubr.bf16.gmra.mrb[0].mxu0 %v184
    %v233 = vpop.f32.mrb[0].mxu0
    %v234 = vadd.f32 0.0, %v233
    %v235 = vpop.f32.mrb[0].mxu0
    %v236 = vadd.f32 0.0, %v235
    %v237 = vpop.f32.mrb[0].mxu0
    %v238 = vadd.f32 0.0, %v237
    %v239 = vpop.f32.mrb[0].mxu0
    %v240 = vadd.f32 0.0, %v239
    %241 = vmatprep.mubr.bf16.mxu0 0
    %242 = vmatmul.mubr.bf16.gmra.mrb[0].mxu0 %v187
    %v243 = vpop.f32.mrb[0].mxu0
    %v244 = vadd.f32 0.0, %v243
    %v245 = vpop.f32.mrb[0].mxu0
    %v246 = vadd.f32 0.0, %v245
    %v247 = vpop.f32.mrb[0].mxu0
    %v248 = vadd.f32 0.0, %v247
    %v249 = vpop.f32.mrb[0].mxu0
    %v250 = vadd.f32 0.0, %v249
    %251 = vdwg.mxu0
    %v252 = vld [vmem:[%s2] sm:$0x77]
    %v253 = vmul.f32 %v252, 0.5
    %v254 = vadd.f32 %v253, 0.5
    %v255 = vmul.f32 %v224, %v152
    %v256 = vmul.f32 %v226, %v153
    %v257 = vmul.f32 %v228, %v154
    %v258 = vmul.f32 %v230, %v155
    %v259 = vadd.f32 %v255, %v257
    %v260 = vrot.slane %v259, 4
    %v261 = vadd.f32 %v259, %v260
    %v262 = vrot.slane %v261, 2
    %v263 = vadd.f32 %v261, %v262
    %v264 = vrot.slane %v263, 1
    %v265 = vadd.f32 %v263, %v264
    %v266 = vadd.f32 %v256, %v258
    %v267 = vrot.slane %v266, 4
    %v268 = vadd.f32 %v266, %v267
    %v269 = vrot.slane %v268, 2
    %v270 = vadd.f32 %v268, %v269
    %v271 = vrot.slane %v270, 1
    %v272 = vadd.f32 %v270, %v271
    %v274 = vlaneseq
    %v275 = vshrl.u32 %v274, 7
    %v276 = vsub.s32 0, %v275
    %v277 = vrot.slane %v97, %v276
    %v278 = vlaneseq
    %v279 = vshrl.u32 %v278, 7
    %v280 = vsub.s32 1, %v279
    %v281 = vrot.slane %v97, %v280
    %v284 = vmul.f32 %v265, %v277
    %v285 = vmul.f32 %v272, %v281
    %v287 = vlaneseq
    %v288 = vshrl.u32 %v287, 7
    %v289 = vsub.s32 0, %v288
    %v290 = vrot.slane %v254, %v289
    %v291 = vlaneseq
    %v292 = vshrl.u32 %v291, 7
    %v293 = vsub.s32 4, %v292
    %v294 = vrot.slane %v254, %v293
    %v297 = vsub.f32 %v284, %v290
    %v298 = vsub.f32 %v285, %v294
    %v299 = vand.u32 2147483647, %v297
    %v300 = vand.u32 2147483647, %v298
    %v301 = vadd.f32 %v299, 0.0
    %v302 = vadd.f32 %v300, 0.0
    %v303 = vmul.f32 %v234, %v152
    %v304 = vmul.f32 %v236, %v153
    %v305 = vmul.f32 %v238, %v154
    %v306 = vmul.f32 %v240, %v155
    %v307 = vadd.f32 %v303, %v305
    %v308 = vrot.slane %v307, 4
    %v309 = vadd.f32 %v307, %v308
    %v310 = vrot.slane %v309, 2
    %v311 = vadd.f32 %v309, %v310
    %v312 = vrot.slane %v311, 1
    %v313 = vadd.f32 %v311, %v312
    %v314 = vadd.f32 %v304, %v306
    %v315 = vrot.slane %v314, 4
    %v316 = vadd.f32 %v314, %v315
    %v317 = vrot.slane %v316, 2
    %v318 = vadd.f32 %v316, %v317
    %v319 = vrot.slane %v318, 1
    %v320 = vadd.f32 %v318, %v319
    %v321 = vmul.f32 %v313, %v277
    %v322 = vmul.f32 %v320, %v281
    %v323 = vlaneseq
    %v324 = vshrl.u32 %v323, 7
    %v325 = vsub.s32 1, %v324
    %v326 = vrot.slane %v254, %v325
    %v327 = vlaneseq
    %v328 = vshrl.u32 %v327, 7
    %v329 = vsub.s32 5, %v328
    %v330 = vrot.slane %v254, %v329
    %v333 = vsub.f32 %v321, %v326
    %v334 = vsub.f32 %v322, %v330
    %v335 = vand.u32 2147483647, %v333
    %v336 = vand.u32 2147483647, %v334
    %v337 = vadd.f32 %v301, %v335
    %v338 = vadd.f32 %v302, %v336
    %v339 = vmul.f32 %v244, %v152
    %v340 = vmul.f32 %v246, %v153
    %v341 = vmul.f32 %v248, %v154
    %v342 = vmul.f32 %v250, %v155
    %v343 = vadd.f32 %v339, %v341
    %v344 = vrot.slane %v343, 4
    %v345 = vadd.f32 %v343, %v344
    %v346 = vrot.slane %v345, 2
    %v347 = vadd.f32 %v345, %v346
    %v348 = vrot.slane %v347, 1
    %v349 = vadd.f32 %v347, %v348
    %v350 = vadd.f32 %v340, %v342
    %v351 = vrot.slane %v350, 4
    %v352 = vadd.f32 %v350, %v351
    %v353 = vrot.slane %v352, 2
    %v354 = vadd.f32 %v352, %v353
    %v355 = vrot.slane %v354, 1
    %v356 = vadd.f32 %v354, %v355
    %v357 = vmul.f32 %v349, %v277
    %v358 = vmul.f32 %v356, %v281
    %v359 = vlaneseq
    %v360 = vshrl.u32 %v359, 7
    %v361 = vsub.s32 2, %v360
    %v362 = vrot.slane %v254, %v361
    %v363 = vlaneseq
    %v364 = vshrl.u32 %v363, 7
    %v365 = vsub.s32 6, %v364
    %v366 = vrot.slane %v254, %v365
    %v369 = vsub.f32 %v357, %v362
    %v370 = vsub.f32 %v358, %v366
    %v371 = vand.u32 2147483647, %v369
    %v372 = vand.u32 2147483647, %v370
    %v373 = vadd.f32 %v337, %v371
    %v374 = vadd.f32 %v338, %v372
    %s375 = scalar_lea.vmem %s3, 4
    %v376 = vld [vmem:[%s375] sm:$0xf]
    %s377 = scalar_lea.vmem %s4, 4
    %v378 = vld [vmem:[%s377] sm:$0xf]
    %v379 = vsub.f32 %v376, %v378
    %v380 = vand.u32 2147483647, %v379
    %v381 = vadd.f32 %v34, %v380
    %v384 = vunpack.c.l.s4 1966171168
    %v385 = vunpack.c.0.s8 %v384
    %v386 = vlaneseq
    %v387 = vshrl.u32 %v386, 7
    %v388 = vsub.s32 %v385, %v387
    %v389 = vrot.slane %v376, %v388
    %v391 = vadd.f32 %v22, %v389
    %v392 = vmul.f32 %v391, 1.0666667
    %v393 = vsub.f32 %v392, 0.5
    %v394 = vcombine.high %v389, %v389
    %v396 = vadd.f32 %v24, %v394
    %v397 = vmul.f32 %v396, 1.0666667
    %v398 = vsub.f32 %v397, 0.5
    %v399 = vfloor.f32 %v393
    %v400 = vfloor.f32 %v398
    %v401 = vadd.f32 %v399, 1.0
    %v402 = vadd.f32 %v400, 1.0
    %v403 = vsub.f32 %v393, %v399
    %v404 = vsub.f32 1.0, %v403
    %v405 = vsub.f32 %v398, %v400
    %v406 = vsub.f32 1.0, %v405
    %vm407 = vcmp.ge.f32.partialorder %v399, 0.0
    %vm408 = vcmp.le.f32.partialorder %v399, 15.0
    %vm409 = vmand %vm407, %vm408
    %v410 = vsel %vm409, 1, 0
    %v411 = vcvt.s32.f32 %v410
    %vm412 = vcmp.ge.f32.partialorder %v401, 0.0
    %vm413 = vcmp.le.f32.partialorder %v401, 15.0
    %vm414 = vmand %vm412, %vm413
    %v415 = vsel %vm414, 1, 0
    %v416 = vcvt.s32.f32 %v415
    %vm417 = vcmp.ge.f32.partialorder %v400, 0.0
    %vm418 = vcmp.le.f32.partialorder %v400, 15.0
    %vm419 = vmand %vm417, %vm418
    %v420 = vsel %vm419, 1, 0
    %v421 = vcvt.s32.f32 %v420
    %vm422 = vcmp.ge.f32.partialorder %v402, 0.0
    %vm423 = vcmp.le.f32.partialorder %v402, 15.0
    %vm424 = vmand %vm422, %vm423
    %v425 = vsel %vm424, 1, 0
    %v426 = vcvt.s32.f32 %v425
    %v427 = vmul.f32 %v406, %v404
    %v428 = vmul.f32 %v427, %v421
    %v429 = vmul.f32 %v428, %v411
    %v430 = vmul.f32 %v406, %v403
    %v431 = vmul.f32 %v430, %v421
    %v432 = vmul.f32 %v431, %v416
    %v433 = vadd.f32 %v429, %v432
    %v434 = vmul.f32 %v405, %v404
    %v435 = vmul.f32 %v434, %v426
    %v436 = vmul.f32 %v435, %v411
    %v437 = vadd.f32 %v433, %v436
    %v438 = vmul.f32 %v405, %v403
    %v439 = vmul.f32 %v438, %v426
    %v440 = vmul.f32 %v439, %v416
    %v441 = vadd.f32 %v437, %v440
    %vm442 = vcmp.ge.f32.partialorder %v441, 0.9999
    %v443 = vsel %vm442, 1, 0
    %v444 = vcvt.s32.f32 %v443
    %v445 = vmax.f32 %v393, 0.0
    %v446 = vmin.f32 %v445, 15.0
    %v447 = vmax.f32 %v398, 0.0
    %v448 = vmin.f32 %v447, 15.0
    %v450 = vlaneseq
    %v451 = vshrl.u32 %v450, 7
    %v452 = vsub.s32 0, %v451
    %v453 = vrot.slane %v446, %v452
    %v454 = vlaneseq
    %v455 = vshrl.u32 %v454, 7
    %v456 = vsub.s32 1, %v455
    %v457 = vrot.slane %v446, %v456
    %v460 = vsub.f32 %v28, %v453
    %v461 = vsub.f32 %v28, %v457
    %v462 = vsub.f32 %v29, %v453
    %v463 = vsub.f32 %v29, %v457
    %v464 = vand.u32 2147483647, %v460
    %v465 = vand.u32 2147483647, %v461
    %v466 = vand.u32 2147483647, %v462
    %v467 = vand.u32 2147483647, %v463
    %v468 = vsub.f32 1.0, %v464
    %v469 = vsub.f32 1.0, %v465
    %v470 = vsub.f32 1.0, %v466
    %v471 = vsub.f32 1.0, %v467
    %v472 = vmax.f32 %v468, 0.0
    %v473 = vmax.f32 %v469, 0.0
    %v474 = vmax.f32 %v470, 0.0
    %v475 = vmax.f32 %v471, 0.0
    %v477 = vlaneseq
    %v478 = vshrl.u32 %v477, 7
    %v479 = vsub.s32 0, %v478
    %v480 = vrot.slane %v448, %v479
    %v481 = vlaneseq
    %v482 = vshrl.u32 %v481, 7
    %v483 = vsub.s32 1, %v482
    %v484 = vrot.slane %v448, %v483
    %v487 = vsub.f32 %v28, %v480
    %v488 = vsub.f32 %v28, %v484
    %v489 = vsub.f32 %v29, %v480
    %v490 = vsub.f32 %v29, %v484
    %v491 = vand.u32 2147483647, %v487
    %v492 = vand.u32 2147483647, %v488
    %v493 = vand.u32 2147483647, %v489
    %v494 = vand.u32 2147483647, %v490
    %v495 = vsub.f32 1.0, %v491
    %v496 = vsub.f32 1.0, %v492
    %v497 = vsub.f32 1.0, %v493
    %v498 = vsub.f32 1.0, %v494
    %v499 = vmax.f32 %v495, 0.0
    %v500 = vmax.f32 %v496, 0.0
    %v501 = vmax.f32 %v497, 0.0
    %v502 = vmax.f32 %v498, 0.0
    %s503 = scalar_lea.vmem %s1, 48
    %v504 = vld [vmem:[%s503] sm:$0xff]
    %v505 = vld [vmem:[%s503 + $0x8] sm:$0xff]
    %v506 = vld [vmem:[%s503 + $0x10] sm:$0xff]
    %v507 = vld [vmem:[%s503 + $0x18] sm:$0xff]
    %v508 = vld [vmem:[%s503 + $0x20] sm:$0xff]
    %v509 = vld [vmem:[%s503 + $0x28] sm:$0xff]
    %v510 = vmul.f32 %v504, 0.5
    %v511 = vmul.f32 %v505, 0.5
    %v512 = vmul.f32 %v506, 0.5
    %v513 = vmul.f32 %v507, 0.5
    %v514 = vmul.f32 %v508, 0.5
    %v515 = vmul.f32 %v509, 0.5
    %v516 = vadd.f32 %v510, 0.5
    %v517 = vadd.f32 %v511, 0.5
    %v518 = vadd.f32 %v512, 0.5
    %v519 = vadd.f32 %v513, 0.5
    %v520 = vadd.f32 %v514, 0.5
    %v521 = vadd.f32 %v515, 0.5
    %v522 = vpack.c.bf16 %v517, %v516
    %v523 = vpack.c.bf16 %v519, %v518
    %v524 = vpack.c.bf16 %v521, %v520
    %v525 = vpack.c.bf16 %v474, %v472
    %v526 = vpack.c.bf16 %v475, %v473
    %v528 = vsel %vm179, %v522, 0
    %v531 = vsel %vm179, %v523, 0
    %v534 = vsel %vm179, %v524, 0
    %536 = vmatprep.subr.bf16.mxu0 %v526
    %537 = vmatpush1.bf16.msra.mxu0 %v525
    %538 = vmatprep.subr.bf16.mxu0 0
    %539 = vmatpush1.bf16.msra.mxu0 0
    %540 = vmatprep.subr.bf16.mxu0 0
    %541 = vmatpush1.bf16.msra.mxu0 0
    %542 = vmatprep.subr.bf16.mxu0 0
    %543 = vmatpush1.bf16.msra.mxu0 0
    %544 = vmatprep.subr.bf16.mxu0 0
    %545 = vmatpush1.bf16.msra.mxu0 0
    %546 = vmatprep.subr.bf16.mxu0 0
    %547 = vmatpush1.bf16.msra.mxu0 0
    %548 = vmatprep.subr.bf16.mxu0 0
    %549 = vmatpush1.bf16.msra.mxu0 0
    %550 = vmatprep.subr.bf16.mxu0 0
    %551 = vmatpush1.bf16.msra.mxu0 0
    %552 = vmatprep.subr.bf16.mxu0 0
    %553 = vmatpush1.bf16.msra.mxu0 0
    %554 = vmatprep.subr.bf16.mxu0 0
    %555 = vmatpush1.bf16.msra.mxu0 0
    %556 = vmatprep.subr.bf16.mxu0 0
    %557 = vmatpush1.bf16.msra.mxu0 0
    %558 = vmatprep.subr.bf16.mxu0 0
    %559 = vmatpush1.bf16.msra.mxu0 0
    %560 = vmatprep.subr.bf16.mxu0 0
    %561 = vmatpush1.bf16.msra.mxu0 0
    %562 = vmatprep.subr.bf16.mxu0 0
    %563 = vmatpush1.bf16.msra.mxu0 0
    %564 = vmatprep.subr.bf16.mxu0 0
    %565 = vmatpush1.bf16.msra.mxu0 0
    %566 = vmatprep.subr.bf16.mxu0 0
    %567 = vmatpush1.bf16.msra.mxu0 0
    %568 = vmatprep.mubr.bf16.mxu0 0
    %569 = vmatmul.mubr.bf16.gmra.mrb[0].mxu0 %v528
    %v570 = vpop.f32.mrb[0].mxu0
    %v571 = vadd.f32 0.0, %v570
    %v572 = vpop.f32.mrb[0].mxu0
    %v573 = vadd.f32 0.0, %v572
    %v574 = vpop.f32.mrb[0].mxu0
    %v575 = vadd.f32 0.0, %v574
    %v576 = vpop.f32.mrb[0].mxu0
    %v577 = vadd.f32 0.0, %v576
    %578 = vmatprep.mubr.bf16.mxu0 0
    %579 = vmatmul.mubr.bf16.gmra.mrb[0].mxu0 %v531
    %v580 = vpop.f32.mrb[0].mxu0
    %v581 = vadd.f32 0.0, %v580
    %v582 = vpop.f32.mrb[0].mxu0
    %v583 = vadd.f32 0.0, %v582
    %v584 = vpop.f32.mrb[0].mxu0
    %v585 = vadd.f32 0.0, %v584
    %v586 = vpop.f32.mrb[0].mxu0
    %v587 = vadd.f32 0.0, %v586
    %588 = vmatprep.mubr.bf16.mxu0 0
    %589 = vmatmul.mubr.bf16.gmra.mrb[0].mxu0 %v534
    %v590 = vpop.f32.mrb[0].mxu0
    %v591 = vadd.f32 0.0, %v590
    %v592 = vpop.f32.mrb[0].mxu0
    %v593 = vadd.f32 0.0, %v592
    %v594 = vpop.f32.mrb[0].mxu0
    %v595 = vadd.f32 0.0, %v594
    %v596 = vpop.f32.mrb[0].mxu0
    %v597 = vadd.f32 0.0, %v596
    %598 = vdwg.mxu0
    %s599 = scalar_lea.vmem %s2, 8
    %v600 = vld [vmem:[%s599] sm:$0x77]
    %v601 = vmul.f32 %v600, 0.5
    %v602 = vadd.f32 %v601, 0.5
    %v603 = vmul.f32 %v571, %v499
    %v604 = vmul.f32 %v573, %v500
    %v605 = vmul.f32 %v575, %v501
    %v606 = vmul.f32 %v577, %v502
    %v607 = vadd.f32 %v603, %v605
    %v608 = vrot.slane %v607, 4
    %v609 = vadd.f32 %v607, %v608
    %v610 = vrot.slane %v609, 2
    %v611 = vadd.f32 %v609, %v610
    %v612 = vrot.slane %v611, 1
    %v613 = vadd.f32 %v611, %v612
    %v614 = vadd.f32 %v604, %v606
    %v615 = vrot.slane %v614, 4
    %v616 = vadd.f32 %v614, %v615
    %v617 = vrot.slane %v616, 2
    %v618 = vadd.f32 %v616, %v617
    %v619 = vrot.slane %v618, 1
    %v620 = vadd.f32 %v618, %v619
    %v622 = vlaneseq
    %v623 = vshrl.u32 %v622, 7
    %v624 = vsub.s32 0, %v623
    %v625 = vrot.slane %v444, %v624
    %v626 = vlaneseq
    %v627 = vshrl.u32 %v626, 7
    %v628 = vsub.s32 1, %v627
    %v629 = vrot.slane %v444, %v628
    %v632 = vmul.f32 %v613, %v625
    %v633 = vmul.f32 %v620, %v629
    %v635 = vlaneseq
    %v636 = vshrl.u32 %v635, 7
    %v637 = vsub.s32 0, %v636
    %v638 = vrot.slane %v602, %v637
    %v639 = vlaneseq
    %v640 = vshrl.u32 %v639, 7
    %v641 = vsub.s32 4, %v640
    %v642 = vrot.slane %v602, %v641
    %v645 = vsub.f32 %v632, %v638
    %v646 = vsub.f32 %v633, %v642
    %v647 = vand.u32 2147483647, %v645
    %v648 = vand.u32 2147483647, %v646
    %v649 = vadd.f32 %v373, %v647
    %v650 = vadd.f32 %v374, %v648
    %v651 = vmul.f32 %v581, %v499
    %v652 = vmul.f32 %v583, %v500
    %v653 = vmul.f32 %v585, %v501
    %v654 = vmul.f32 %v587, %v502
    %v655 = vadd.f32 %v651, %v653
    %v656 = vrot.slane %v655, 4
    %v657 = vadd.f32 %v655, %v656
    %v658 = vrot.slane %v657, 2
    %v659 = vadd.f32 %v657, %v658
    %v660 = vrot.slane %v659, 1
    %v661 = vadd.f32 %v659, %v660
    %v662 = vadd.f32 %v652, %v654
    %v663 = vrot.slane %v662, 4
    %v664 = vadd.f32 %v662, %v663
    %v665 = vrot.slane %v664, 2
    %v666 = vadd.f32 %v664, %v665
    %v667 = vrot.slane %v666, 1
    %v668 = vadd.f32 %v666, %v667
    %v669 = vmul.f32 %v661, %v625
    %v670 = vmul.f32 %v668, %v629
    %v671 = vlaneseq
    %v672 = vshrl.u32 %v671, 7
    %v673 = vsub.s32 1, %v672
    %v674 = vrot.slane %v602, %v673
    %v675 = vlaneseq
    %v676 = vshrl.u32 %v675, 7
    %v677 = vsub.s32 5, %v676
    %v678 = vrot.slane %v602, %v677
    %v681 = vsub.f32 %v669, %v674
    %v682 = vsub.f32 %v670, %v678
    %v683 = vand.u32 2147483647, %v681
    %v684 = vand.u32 2147483647, %v682
    %v685 = vadd.f32 %v649, %v683
    %v686 = vadd.f32 %v650, %v684
    %v687 = vmul.f32 %v591, %v499
    %v688 = vmul.f32 %v593, %v500
    %v689 = vmul.f32 %v595, %v501
    %v690 = vmul.f32 %v597, %v502
    %v691 = vadd.f32 %v687, %v689
    %v692 = vrot.slane %v691, 4
    %v693 = vadd.f32 %v691, %v692
    %v694 = vrot.slane %v693, 2
    %v695 = vadd.f32 %v693, %v694
    %v696 = vrot.slane %v695, 1
    %v697 = vadd.f32 %v695, %v696
    %v698 = vadd.f32 %v688, %v690
    %v699 = vrot.slane %v698, 4
    %v700 = vadd.f32 %v698, %v699
    %v701 = vrot.slane %v700, 2
    %v702 = vadd.f32 %v700, %v701
    %v703 = vrot.slane %v702, 1
    %v704 = vadd.f32 %v702, %v703
    %v705 = vmul.f32 %v697, %v625
    %v706 = vmul.f32 %v704, %v629
    %v707 = vlaneseq
    %v708 = vshrl.u32 %v707, 7
    %v709 = vsub.s32 2, %v708
    %v710 = vrot.slane %v602, %v709
    %v711 = vlaneseq
    %v712 = vshrl.u32 %v711, 7
    %v713 = vsub.s32 6, %v712
    %v714 = vrot.slane %v602, %v713
    %v717 = vsub.f32 %v705, %v710
    %v718 = vsub.f32 %v706, %v714
    %v719 = vand.u32 2147483647, %v717
    %v720 = vand.u32 2147483647, %v718
    %v721 = vadd.f32 %v685, %v719
    %v722 = vadd.f32 %v686, %v720
    %v725 = vunpack.c.l.s4 1983009808
    %v726 = vunpack.c.0.s8 %v725
    %v727 = vlaneseq
    %v728 = vshrl.u32 %v727, 7
    %v729 = vsub.s32 %v726, %v728
    %v730 = vrot.slane %v381, %v729
    %v731 = vcombine.high %v730, %v730
    %vm734 = vcmask 1041408
    %v735 = vsel %vm734, %v730, 0.0
    %v736 = vsel %vm734, %v731, 0.0
    %v737 = vadd.f32 %v735, %v736
    %738 = vadd.xlane.f32.xlu0 %v737
    %v739 = vpop.xlane.xlu0 %738
    %v740 = vrot.slane %v739, 4
    %v741 = vadd.f32 %v739, %v740
    %v742 = vrot.slane %v741, 2
    %v743 = vadd.f32 %v741, %v742
    %v744 = vrot.slane %v743, 1
    %v745 = vadd.f32 %v743, %v744
    %s746 = vtos %v745
    %vm747 = vcmask 1040384
    %v748 = vsel %vm747, %v721, 0.0
    %v749 = vsel %vm747, %v722, 0.0
    %v750 = vadd.f32 %v748, %v749
    %751 = vadd.xlane.f32.xlu0 %v750
    %v752 = vpop.xlane.xlu0 %751
    %v753 = vrot.slane %v752, 4
    %v754 = vadd.f32 %v752, %v753
    %v755 = vrot.slane %v754, 2
    %v756 = vadd.f32 %v754, %v755
    %v757 = vrot.slane %v756, 1
    %v758 = vadd.f32 %v756, %v757
    %s759 = vtos %v758
    %v760 = vlaneseq
    %v761 = vand.u32 %v760, 127
    %vm762 = vcmp.eq.s32.totalorder %v26, 0
    %vm763 = vcmp.eq.s32.totalorder %v761, 0
    %vm764 = vmand %vm762, %vm763
    %v765 = vstv %s746
    %v766 = vsel %vm764, %v765, 0.0
    %vm767 = vcmp.eq.s32.totalorder %v761, 1
    %vm768 = vmand %vm762, %vm767
    %v769 = vstv %s759
    %v770 = vsel %vm768, %v769, 0.0
    %v771 = vadd.f32 %v766, %v770
    %772 = vst [vmem:[#allocation2] sm:$0xff] %v771
    // Predicated region
    $region22: #{tpu_custom_call.1} parent=1 // pred_check
      _
    $region23: #{tpu_custom_call.1} parent=1 // pred_check_branch
      %774 = sbr.rel (0) target = $region25
    $region24: #{tpu_custom_call.1} parent=1 // pred_region
      %s776 = ssub.s32 128, 128
      %777 = vsyncadd [#allocation3], %s776
      %s779 = sshll.u32 [#allocation2], 4
      %s780 = int_to_ptr.vmem [resolvable:$true] %s779
      %782 = dma.vmem_to_hbm [thread:$0]  %s780, 128, %s5, [#allocation3]
    $region25: #{tpu_custom_call.1} parent=1 // pred_fallthru
      _
    // Predicated region
    $region26: #{tpu_custom_call.1} parent=1 // pred_check
      _
    $region27: #{tpu_custom_call.1} parent=1 // pred_check_branch
      %784 = sbr.rel (0) target = $region29
    $region28: #{tpu_custom_call.1} parent=1 // pred_region
      %785 = dma.done [#allocation3], 128
    $region29: #{tpu_custom_call.1} parent=1 // pred_fallthru
      _
    %786 = vsyncpa [#allocation3], 1

</llo_original>
